<compile_context>
chip_gen: v6e
topology: v6e:2x2x1
jax: 0.10.0
libtpu: 0.0.40
codegen_flags: <defaults>
</compile_context>

<pallas_src>
import jax
import jax.numpy as jnp
from jax.experimental import pallas as pl
from jax.experimental.pallas import tpu as pltpu

block_size = 256
n_embed = 384


def _round_up(x, m):
    return ((x + m - 1) // m) * m


def _head_kernel(x_ref, w_ref, o_ref, k_s, q_s, v_s):
    # x_ref: (Tp, C)   w_ref: (C, 3H) = [Wk | Wq | Wv]   o_ref: (Tq, H)
    # k_s / q_s / v_s: (Tp, H) VMEM scratch, persistent across the query-tile grid axis.
    qi = pl.program_id(1)
    Tq, H = o_ref.shape
    C = x_ref.shape[1]
    Tk = Tq  # key tile size

    # ---- Fused QKV projection, computed once per batch element (qi == 0) ----
    @pl.when(qi == 0)
    def _():
        qkv = jnp.dot(x_ref[...], w_ref[...], preferred_element_type=jnp.float32)  # (Tp, 3H)
        scale = 1.0 / (C ** 0.5)                    # module scales by C**-0.5 (embedding dim)
        k_s[...] = qkv[:, :H].astype(k_s.dtype)
        q_s[...] = (qkv[:, H:2 * H] * scale).astype(q_s.dtype)  # fold scale into q
        v_s[...] = qkv[:, 2 * H:].astype(v_s.dtype)

    # ---- This query tile ----
    q_start = pl.multiple_of(qi * Tq, Tq)
    q_tile = q_s[pl.ds(q_start, Tq), :]                                   # (Tq, H)

    def attend(k_start, m, l, acc, masked):
        k_tile = k_s[pl.ds(k_start, Tk), :]                               # (Tk, H)
        v_tile = v_s[pl.ds(k_start, Tk), :]                               # (Tk, H)
        # q @ k^T without materializing a transpose of k; bf16 operands on the bf16 path.
        s = jax.lax.dot_general(
            q_tile, k_tile,
            dimension_numbers=(((1,), (1,)), ((), ())),
            preferred_element_type=jnp.float32)                           # (Tq, Tk) f32
        if masked:  # only the diagonal tile needs the causal mask
            row_ids = q_start + jax.lax.broadcasted_iota(jnp.int32, (Tq, 1), 0)
            col_ids = k_start + jax.lax.broadcasted_iota(jnp.int32, (1, Tk), 1)
            s = jnp.where(row_ids >= col_ids, s, -jnp.inf)
        m_new = jnp.maximum(m, jnp.max(s, axis=-1, keepdims=True))
        alpha = jnp.exp(m - m_new)
        p = jnp.exp(s - m_new)
        l_new = alpha * l + jnp.sum(p, axis=-1, keepdims=True)
        # Cast p to the k/q/v scratch dtype (bf16 on the bf16 path) so PV hits the MXU's
        # native operand width; accumulation stays f32.
        acc_new = alpha * acc + jnp.dot(p.astype(v_s.dtype), v_tile,
                                        preferred_element_type=jnp.float32)
        return m_new, l_new, acc_new

    # ---- Online-softmax over strictly-below-diagonal key tiles: no mask work at all ----
    def kv_step(j, carry):
        m, l, acc = carry
        k_start = pl.multiple_of(j * Tk, Tk)
        return attend(k_start, m, l, acc, masked=False)

    m0 = jnp.full((Tq, 1), -jnp.inf, jnp.float32)
    l0 = jnp.zeros((Tq, 1), jnp.float32)
    acc0 = jnp.zeros((Tq, H), jnp.float32)
    m, l, acc = jax.lax.fori_loop(0, qi, kv_step, (m0, l0, acc0))

    # ---- Diagonal key tile (j == qi): the only tile that applies the causal mask ----
    m, l, acc = attend(q_start, m, l, acc, masked=True)

    # Exact reciprocal so the f32 path matches the reference to 1e-4
    # (approx=True would route to the EUP but loosens numerics slightly).
    o_ref[...] = (acc * pl.reciprocal(l, approx=False)).astype(o_ref.dtype)


def head_forward(x, wk, wq, wv, *, use_bf16_matmul=False):
    """x: (B, T, C); wk/wq/wv: (C, H) -> (B, T, H).

    use_bf16_matmul: cast x / the fused weight to bf16 AND hold k/q/v scratch (and the
    softmax probabilities fed to PV) in bf16 so all matmuls present bf16 operands to the
    MXU; accumulation and the softmax math remain f32, output stays in x's dtype.
    """
    B, T, C = x.shape
    H = wk.shape[1]
    out_dtype = x.dtype

    # Fuse the three projection weights: one (C, 3H) matmul instead of three N=64 ones.
    w_qkv = jnp.concatenate([wk, wq, wv], axis=1)  # columns: [k | q | v]

    if use_bf16_matmul:
        x = x.astype(jnp.bfloat16)
        w_qkv = w_qkv.astype(jnp.bfloat16)

    # Query tiling: 128-row tiles, padding T up to a tile multiple (ragged tail rows are
    # masked out by causality and sliced off the output).  Tiny T uses one small tile
    # rounded to the 8-row sublane granule.
    if T >= 128:
        Tq = 128
    else:
        Tq = _round_up(T, 8)
    T_pad = _round_up(T, Tq)
    if T_pad != T:
        x = jnp.pad(x, ((0, 0), (0, T_pad - T), (0, 0)))
    num_q_tiles = T_pad // Tq

    scratch_dtype = jnp.bfloat16 if use_bf16_matmul else jnp.float32

    out = pl.pallas_call(
        _head_kernel,
        out_shape=jax.ShapeDtypeStruct((B, T_pad, H), out_dtype),
        grid_spec=pltpu.PrefetchScalarGridSpec(
            num_scalar_prefetch=0,
            grid=(B, num_q_tiles),
            in_specs=[
                # Full (padded) sequence for this batch element; same block across qi
                # so it is fetched once per batch element.
                pl.BlockSpec((None, T_pad, C), lambda b, qi: (b, 0, 0)),
                # Fused projection weight, constant across the grid.
                pl.BlockSpec((C, 3 * H), lambda b, qi: (0, 0)),
            ],
            out_specs=pl.BlockSpec((None, Tq, H), lambda b, qi: (b, qi, 0)),
            scratch_shapes=[
                pltpu.VMEM((T_pad, H), scratch_dtype),  # k
                pltpu.VMEM((T_pad, H), scratch_dtype),  # q (pre-scaled)
                pltpu.VMEM((T_pad, H), scratch_dtype),  # v
            ],
        ),
        compiler_params=pltpu.CompilerParams(
            # qi axis must be "arbitrary": scratch k/q/v computed at qi == 0 is
            # reused by later qi of the same batch element.
            dimension_semantics=("parallel", "arbitrary"),
        ),
    )(x, w_qkv)

    if T_pad != T:
        out = out[:, :T, :]
    return out


def _reference(x, wk, wq, wv):
    B, T, C = x.shape
    k = x @ wk
    q = x @ wq
    v = x @ wv
    wei = (q @ jnp.swapaxes(k, -2, -1)) * (C ** -0.5)
    mask = jnp.tril(jnp.ones((T, T), dtype=bool))
    wei = jnp.where(mask, wei, -jnp.inf)
    wei = jax.nn.softmax(wei, axis=-1)
    return wei @ v


if __name__ == "__main__":
    key = jax.random.PRNGKey(0)
    k0, k1, k2, k3 = jax.random.split(key, 4)

    B, T, C, H = 2, 8, n_embed, 64          # small shape (T <= block_size)
    bound = 1.0 / (C ** 0.5)                # nn.Linear default init range

    x = jax.random.normal(k0, (B, T, C), dtype=jnp.float32)
    wk = jax.random.uniform(k1, (C, H), jnp.float32, -bound, bound)
    wq = jax.random.uniform(k2, (C, H), jnp.float32, -bound, bound)
    wv = jax.random.uniform(k3, (C, H), jnp.float32, -bound, bound)

    # Small-T path (single small query tile).
    out = head_forward(x, wk, wq, wv)
    jax.block_until_ready(out)
    ref = _reference(x, wk, wq, wv)
    assert out.shape == (B, T, H)
    assert jnp.allclose(out, ref, atol=1e-4, rtol=1e-4), "mismatch vs reference (T=8)"

    # Full block_size path (128-row query tiles + off-diagonal unmasked key-tile loop).
    T2 = block_size
    x2 = jax.random.normal(k0, (B, T2, C), dtype=jnp.float32)
    out2 = head_forward(x2, wk, wq, wv)
    jax.block_until_ready(out2)
    ref2 = _reference(x2, wk, wq, wv)
    assert jnp.allclose(out2, ref2, atol=1e-4, rtol=1e-4), "mismatch vs reference (T=256)"

    # Ragged-T path (pads to a 128-row tile multiple; padded rows masked / sliced off).
    T3 = 200
    x3 = jax.random.normal(k1, (B, T3, C), dtype=jnp.float32)
    out3 = head_forward(x3, wk, wq, wv)
    jax.block_until_ready(out3)
    ref3 = _reference(x3, wk, wq, wv)
    assert out3.shape == (B, T3, H)
    assert jnp.allclose(out3, ref3, atol=1e-4, rtol=1e-4), "mismatch vs reference (T=200)"

    # bf16 MXU-operand path (projection + QK^T + PV all bf16, f32 accumulation) —
    # looser tolerance for bf16 rounding of x/w/k/q/v/p.
    out2_bf16 = head_forward(x2, wk, wq, wv, use_bf16_matmul=True)
    jax.block_until_ready(out2_bf16)
    assert jnp.allclose(out2_bf16, ref2, atol=5e-2, rtol=5e-2), "mismatch vs reference (bf16)"

    print("KERNEL_OK")
</pallas_src>

<mosaic_0001>
module attributes {stable_mosaic.version = 11 : i64} {
  func.func @_head_kernel(%arg0: i32, %arg1: i32, %arg2: memref<1x8x384xf32, #tpu.memory_space<vmem>>, %arg3: memref<384x192xf32, #tpu.memory_space<vmem>>, %arg4: memref<1x8x64xf32, #tpu.memory_space<vmem>>, %arg5: memref<8x64xf32, #tpu.memory_space<vmem>>, %arg6: memref<8x64xf32, #tpu.memory_space<vmem>>, %arg7: memref<8x64xf32, #tpu.memory_space<vmem>>) attributes {dimension_semantics = [#tpu.dimension_semantics<parallel>, #tpu.dimension_semantics<arbitrary>], iteration_bounds = array<i64: 2, 1>, scalar_prefetch = 0 : i64, scratch_operands = 3 : i64, tpu.core_type = #tpu.core_type<tc>, window_params = [{transform_indices = @transform_0, window_bounds = array<i64: 1, 8, 384>}, {pipeline_mode = #tpu.pipeline_mode<synchronous>, transform_indices = @transform_1, window_bounds = array<i64: 384, 192>}, {transform_indices = @transform_2, window_bounds = array<i64: 1, 8, 64>}]} {
    %c0_i32 = arith.constant 0 : i32
    %0 = arith.cmpi eq, %arg1, %c0_i32 : i32
    %1 = arith.extui %0 : i1 to i32
    %c0_i32_0 = arith.constant 0 : i32
    %2 = arith.cmpi ne, %1, %c0_i32_0 : i32
    scf.if %2 {
      %c0_14 = arith.constant 0 : index
      %c0_15 = arith.constant 0 : index
      %c0_16 = arith.constant 0 : index
      %51 = vector.load %arg2[%c0_14, %c0_15, %c0_16] : memref<1x8x384xf32, #tpu.memory_space<vmem>>, vector<1x8x384xf32>
      %52 = vector.shape_cast %51 : vector<1x8x384xf32> to vector<8x384xf32>
      %c0_17 = arith.constant 0 : index
      %c0_18 = arith.constant 0 : index
      %53 = vector.load %arg3[%c0_17, %c0_18] : memref<384x192xf32, #tpu.memory_space<vmem>>, vector<384x192xf32>
      %cst_19 = arith.constant dense<0.000000e+00> : vector<8x192xf32>
      %54 = tpu.matmul %52, %53, %cst_19 {dimension_numbers = #tpu.dot_dimension_numbers<[1], [0], [0], [1], [0, 0, 1, 1], [], []>} : vector<8x384xf32>, vector<384x192xf32>, vector<8x192xf32> -> vector<8x192xf32>
      %55 = vector.extract_strided_slice %54 {offsets = [0, 0], sizes = [8, 64], strides = [1, 1]} : vector<8x192xf32> to vector<8x64xf32>
      %c0_20 = arith.constant 0 : index
      %c0_21 = arith.constant 0 : index
      %56 = vector.load %arg5[%c0_20, %c0_21] : memref<8x64xf32, #tpu.memory_space<vmem>>, vector<8x64xf32>
      tpu.vector_store %arg5[%c0_20, %c0_21], %55 {strides = array<i32>} : memref<8x64xf32, #tpu.memory_space<vmem>>, vector<8x64xf32>,
      %57 = vector.extract_strided_slice %54 {offsets = [0, 64], sizes = [8, 64], strides = [1, 1]} : vector<8x192xf32> to vector<8x64xf32>
      %cst_22 = arith.constant 0.0510310382 : f32
      %58 = vector.broadcast %cst_22 : f32 to vector<8x64xf32>
      %59 = arith.mulf %57, %58 : vector<8x64xf32>
      %c0_23 = arith.constant 0 : index
      %c0_24 = arith.constant 0 : index
      %60 = vector.load %arg6[%c0_23, %c0_24] : memref<8x64xf32, #tpu.memory_space<vmem>>, vector<8x64xf32>
      tpu.vector_store %arg6[%c0_23, %c0_24], %59 {strides = array<i32>} : memref<8x64xf32, #tpu.memory_space<vmem>>, vector<8x64xf32>,
      %61 = vector.extract_strided_slice %54 {offsets = [0, 128], sizes = [8, 64], strides = [1, 1]} : vector<8x192xf32> to vector<8x64xf32>
      %c0_25 = arith.constant 0 : index
      %c0_26 = arith.constant 0 : index
      %62 = vector.load %arg7[%c0_25, %c0_26] : memref<8x64xf32, #tpu.memory_space<vmem>>, vector<8x64xf32>
      tpu.vector_store %arg7[%c0_25, %c0_26], %61 {strides = array<i32>} : memref<8x64xf32, #tpu.memory_space<vmem>>, vector<8x64xf32>,
    } else {
    }
    %c8_i32 = arith.constant 8 : i32
    %3 = arith.muli %arg1, %c8_i32 : i32
    %4 = tpu.assume_multiple %3, 8 : i32
    %5 = arith.index_cast %4 : i32 to index
    %c0 = arith.constant 0 : index
    %6 = vector.load %arg6[%5, %c0] : memref<8x64xf32, #tpu.memory_space<vmem>>, vector<8x64xf32>
    %cst = arith.constant 0xFF800000 : f32
    %7 = vector.broadcast %cst : f32 to vector<8x1xf32>
    %cst_1 = arith.constant 0.000000e+00 : f32
    %8 = vector.broadcast %cst_1 : f32 to vector<8x1xf32>
    %cst_2 = arith.constant 0.000000e+00 : f32
    %9 = vector.broadcast %cst_2 : f32 to vector<8x64xf32>
    %c0_i32_3 = arith.constant 0 : i32
    %10 = arith.subi %arg1, %c0_i32_3 : i32
    %11 = arith.addi %c0_i32_3, %10 : i32
    %c1_i32 = arith.constant 1 : i32
    %12:3 = scf.for %arg8 = %c0_i32_3 to %11 step %c1_i32 iter_args(%arg9 = %7, %arg10 = %8, %arg11 = %9) -> (vector<8x1xf32>, vector<8x1xf32>, vector<8x64xf32>)  : i32 {
      %c8_i32_14 = arith.constant 8 : i32
      %51 = arith.muli %arg8, %c8_i32_14 : i32
      %52 = tpu.assume_multiple %51, 8 : i32
      %53 = arith.index_cast %52 : i32 to index
      %c0_15 = arith.constant 0 : index
      %54 = vector.load %arg5[%53, %c0_15] : memref<8x64xf32, #tpu.memory_space<vmem>>, vector<8x64xf32>
      %55 = arith.index_cast %52 : i32 to index
      %c0_16 = arith.constant 0 : index
      %56 = vector.load %arg7[%55, %c0_16] : memref<8x64xf32, #tpu.memory_space<vmem>>, vector<8x64xf32>
      %cst_17 = arith.constant dense<0.000000e+00> : vector<8x8xf32>
      %57 = tpu.matmul %6, %54, %cst_17 {dimension_numbers = #tpu.dot_dimension_numbers<[1], [1], [0], [0], [0, 0, 1, 0], [], []>} : vector<8x64xf32>, vector<8x64xf32>, vector<8x8xf32> -> vector<8x8xf32>
      %cst_18 = arith.constant dense<0xFF800000> : vector<8xf32>
      %58 = vector.multi_reduction <maximumf>, %57, %cst_18 [1] : vector<8x8xf32> to vector<8xf32>
      %59 = vector.shape_cast %58 : vector<8xf32> to vector<8x1xf32>
      %60 = arith.maximumf %arg9, %59 : vector<8x1xf32>
      %61 = arith.subf %arg9, %60 : vector<8x1xf32>
      %62 = math.exp %61 : vector<8x1xf32>
      %63 = vector.broadcast %60 : vector<8x1xf32> to vector<8x8xf32>
      %64 = arith.subf %57, %63 : vector<8x8xf32>
      %65 = math.exp %64 : vector<8x8xf32>
      %66 = arith.mulf %62, %arg10 : vector<8x1xf32>
      %cst_19 = arith.constant dense<0.000000e+00> : vector<8xf32>
      %67 = vector.multi_reduction <add>, %65, %cst_19 [1] : vector<8x8xf32> to vector<8xf32>
      %68 = vector.shape_cast %67 : vector<8xf32> to vector<8x1xf32>
      %69 = arith.addf %66, %68 : vector<8x1xf32>
      %70 = vector.broadcast %62 : vector<8x1xf32> to vector<8x64xf32>
      %71 = arith.mulf %70, %arg11 : vector<8x64xf32>
      %cst_20 = arith.constant dense<0.000000e+00> : vector<8x64xf32>
      %72 = tpu.matmul %65, %56, %cst_20 {dimension_numbers = #tpu.dot_dimension_numbers<[1], [0], [0], [1], [0, 0, 1, 1], [], []>} : vector<8x8xf32>, vector<8x64xf32>, vector<8x64xf32> -> vector<8x64xf32>
      %73 = arith.addf %71, %72 : vector<8x64xf32>
      scf.yield %60, %69, %73 : vector<8x1xf32>, vector<8x1xf32>, vector<8x64xf32>
    }
    %13 = arith.index_cast %4 : i32 to index
    %c0_4 = arith.constant 0 : index
    %14 = vector.load %arg5[%13, %c0_4] : memref<8x64xf32, #tpu.memory_space<vmem>>, vector<8x64xf32>
    %15 = arith.index_cast %4 : i32 to index
    %c0_5 = arith.constant 0 : index
    %16 = vector.load %arg7[%15, %c0_5] : memref<8x64xf32, #tpu.memory_space<vmem>>, vector<8x64xf32>
    %cst_6 = arith.constant dense<0.000000e+00> : vector<8x8xf32>
    %17 = tpu.matmul %6, %14, %cst_6 {dimension_numbers = #tpu.dot_dimension_numbers<[1], [1], [0], [0], [0, 0, 1, 0], [], []>} : vector<8x64xf32>, vector<8x64xf32>, vector<8x8xf32> -> vector<8x8xf32>
    %18 = tpu.iota {dimensions = array<i32: 0>} : vector<8x1xi32>
    %19 = vector.broadcast %4 : i32 to vector<8x1xi32>
    %20 = arith.addi %19, %18 : vector<8x1xi32>
    %21 = tpu.iota {dimensions = array<i32: 1>} : vector<1x8xi32>
    %22 = vector.broadcast %4 : i32 to vector<1x8xi32>
    %23 = arith.addi %22, %21 : vector<1x8xi32>
    %24 = vector.broadcast %20 : vector<8x1xi32> to vector<8x8xi32>
    %25 = vector.broadcast %23 : vector<1x8xi32> to vector<8x8xi32>
    %26 = arith.cmpi sge, %24, %25 : vector<8x8xi32>
    %cst_7 = arith.constant 0xFF800000 : f32
    %27 = vector.broadcast %cst_7 : f32 to vector<8x8xf32>
    %28 = arith.select %26, %17, %27 : vector<8x8xi1>, vector<8x8xf32>
    %cst_8 = arith.constant dense<0xFF800000> : vector<8xf32>
    %29 = vector.multi_reduction <maximumf>, %28, %cst_8 [1] : vector<8x8xf32> to vector<8xf32>
    %30 = vector.shape_cast %29 : vector<8xf32> to vector<8x1xf32>
    %31 = arith.maximumf %12#0, %30 : vector<8x1xf32>
    %32 = arith.subf %12#0, %31 : vector<8x1xf32>
    %33 = math.exp %32 : vector<8x1xf32>
    %34 = vector.broadcast %31 : vector<8x1xf32> to vector<8x8xf32>
    %35 = arith.subf %28, %34 : vector<8x8xf32>
    %36 = math.exp %35 : vector<8x8xf32>
    %37 = arith.mulf %33, %12#1 : vector<8x1xf32>
    %cst_9 = arith.constant dense<0.000000e+00> : vector<8xf32>
    %38 = vector.multi_reduction <add>, %36, %cst_9 [1] : vector<8x8xf32> to vector<8xf32>
    %39 = vector.shape_cast %38 : vector<8xf32> to vector<8x1xf32>
    %40 = arith.addf %37, %39 : vector<8x1xf32>
    %41 = vector.broadcast %33 : vector<8x1xf32> to vector<8x64xf32>
    %42 = arith.mulf %41, %12#2 : vector<8x64xf32>
    %cst_10 = arith.constant dense<0.000000e+00> : vector<8x64xf32>
    %43 = tpu.matmul %36, %16, %cst_10 {dimension_numbers = #tpu.dot_dimension_numbers<[1], [0], [0], [1], [0, 0, 1, 1], [], []>} : vector<8x8xf32>, vector<8x64xf32>, vector<8x64xf32> -> vector<8x64xf32>
    %44 = arith.addf %42, %43 : vector<8x64xf32>
    %45 = tpu.reciprocal %40 : vector<8x1xf32> -> vector<8x1xf32>
    %46 = vector.broadcast %45 : vector<8x1xf32> to vector<8x64xf32>
    %47 = arith.mulf %44, %46 : vector<8x64xf32>
    %c0_11 = arith.constant 0 : index
    %c0_12 = arith.constant 0 : index
    %c0_13 = arith.constant 0 : index
    %48 = vector.load %arg4[%c0_11, %c0_12, %c0_13] : memref<1x8x64xf32, #tpu.memory_space<vmem>>, vector<1x8x64xf32>
    %49 = vector.shape_cast %48 : vector<1x8x64xf32> to vector<8x64xf32>
    %50 = vector.shape_cast %47 : vector<8x64xf32> to vector<1x8x64xf32>
    tpu.vector_store %arg4[%c0_11, %c0_12, %c0_13], %50 {strides = array<i32>} : memref<1x8x64xf32, #tpu.memory_space<vmem>>, vector<1x8x64xf32>,
    return
  }
  func.func @transform_0(%arg0: i32, %arg1: i32) -> (i32, i32, i32) {
    %c0_i32 = arith.constant 0 : i32
    %c0_i32_0 = arith.constant 0 : i32
    %c0_i32_1 = arith.constant 0 : i32
    return %arg0, %c0_i32, %c0_i32_0 : i32, i32, i32
  }
  func.func @transform_1(%arg0: i32, %arg1: i32) -> (i32, i32) {
    %c0_i32 = arith.constant 0 : i32
    %c0_i32_0 = arith.constant 0 : i32
    %c0_i32_1 = arith.constant 0 : i32
    return %c0_i32, %c0_i32_0 : i32, i32
  }
  func.func @transform_2(%arg0: i32, %arg1: i32) -> (i32, i32, i32) {
    %c0_i32 = arith.constant 0 : i32
    %c0_i32_0 = arith.constant 0 : i32
    return %arg0, %arg1, %c0_i32 : i32, i32, i32
  }
}

</mosaic_0001>

<llo_original>
// kernel: tpu_custom_call.1
$region0: #{tpu_custom_call.1}
  #allocation0 [shape = 'u32[]', space=smem, size = 0x4, offset = 0x4, fixed_abs, tag = 'smem constant byte address 0x4 - core index']
  #allocation1 [shape = 'u32[144,128]{1,0:T(1,128)}', space=vmem, size = 0x12000, scoped, tag = 'internal scratch']
  #allocation2 [shape = 'f32[8,64]{1,0:T(8,128)}', space=vmem, size = 0x1000, scoped, tag = 'scratch operand']
  #allocation3 [shape = 'f32[8,64]{1,0:T(8,128)}', space=vmem, size = 0x1000, scoped, tag = 'scratch operand']
  #allocation4 [shape = 'f32[8,64]{1,0:T(8,128)}', space=vmem, size = 0x1000, scoped, tag = 'scratch operand']
  %s0 = inlined_call_operand.vmem [shape: f32[2,8,384], index: 0, kind: input, shape index: {}]
  %s1 = inlined_call_operand.vmem [shape: f32[384,192], index: 1, kind: input, shape index: {}]
  %s2 = inlined_call_operand.hbm [shape: f32[2,8,64], index: 2, kind: output, shape index: {}]
  %s3 = sld [smem:[#allocation0]]
  $region52: #{tpu_custom_call.1} parent=0
    _
  %s5 = ssub.s32 1, %s3
  %s6 = scalar_select 0, %s5, %s3
  $region1: #{tpu_custom_call.1} parent=0
    #allocation5 [shape = 'u8[8192]{0}', space=vmem, size = 0x2000, scoped, tag = 'output window, operand 0']
    #allocation6 [shape = 's32[2]{0}', space=sflag, size = 0x8, scoped, tag = 'scoped memory for tpu_custom_call.1']
    %7 = vsyncpa [#allocation6], 0
    %s8 = scalar_lea.sflag [#allocation6], 1
    %9 = vsyncpa %s8, 0
    loop: start=0, step=1, limit=4
    $region2: #{tpu_custom_call.1} parent=1 // loop_pre_header
      _
    $region3: #{tpu_custom_call.1} parent=1 // loop_header
      %s11 = sphi 0, %s15
      %p12 = scmp.ge.s32.totalorder %s11, 4
      %s18 = sphi 0, %s30
      %s19 = sphi 0, %s26
      %s20 = sphi 0, %s18
      %s21 = sphi 0, %s19
      %s22 = sphi 0, %s20
      %s23 = sphi 0, %s21
      %s33 = sphi 0, %s35
      %s36 = sphi 0, %s33
      %s37 = sphi 0, %s36
      %s53 = sphi 0, %s37
      %s57 = sphi 0, %s57
      %s59 = sphi 0, %s57
      %s60 = sphi 0, %s59
      %s74 = sphi 0, %s60
      %s82 = sphi 0, %s84
      %s85 = sphi 0, %s82
      %s86 = sphi 0, %s85
      %s102 = sphi 0, %s86
    $region4: #{tpu_custom_call.1} parent=1 // loop_header_branch
      %14 = sbr.rel (%p12) target = $region8
    $region5: #{tpu_custom_call.1} parent=1 // loop_body
      %s16 = ssub.s32 %s11, 1
      %s17 = ssub.s32 %s11, 2
      %s24 = sadd.s32 1, %s19
      %p25 = scmp.ge.s32.totalorder %s24, 1
      %s26 = scalar_select %p25, 0, %s24
      %s27 = sadd.s32 1, %s18
      %s28 = scalar_select %p25, %s27, %s18
      %p29 = scmp.ge.s32.totalorder %s28, 2
      %s30 = scalar_select %p29, 0, %s28
      %s31 = ssub.s32 %s18, %s30
      %p32 = scmp.eq.s32.totalorder %s31, 0
      %s34 = sadd.s32 %s33, 1
      %s35 = scalar_select %p32, %s33, %s34
      %p38 = pneg %p32
      %p39 = scmp.eq.s32.totalorder %s11, 1
      %p40 = por %p38, %p39
      %p41 = scmp.ne.s32.totalorder %s33, %s36
      %p42 = scmp.eq.s32.totalorder %s11, 0
      %p43 = por %p41, %p42
      %p44 = scmp.ne.s32.totalorder %s33, %s36
      %p45 = scmp.eq.s32.totalorder %s16, 1
      %p46 = por %p44, %p45
      %p47 = scmp.ne.s32.totalorder %s36, %s37
      %p48 = scmp.eq.s32.totalorder %s16, 0
      %p49 = por %p47, %p48
      %p50 = scmp.ne.s32.totalorder %s36, %s37
      %p51 = scmp.eq.s32.totalorder %s17, 1
      %p52 = por %p50, %p51
      %p54 = scmp.ne.s32.totalorder %s37, %s53
      %p55 = scmp.eq.s32.totalorder %s17, 0
      %p56 = por %p54, %p55
      %s58 = sadd.s32 %s57, 1
      %p61 = scmp.eq.s32.totalorder %s11, 1
      %p62 = scmp.ne.s32.totalorder %s57, %s59
      %p63 = scmp.eq.s32.totalorder %s11, 0
      %p64 = por %p62, %p63
      %p65 = scmp.ne.s32.totalorder %s57, %s59
      %p66 = scmp.eq.s32.totalorder %s16, 1
      %p67 = por %p65, %p66
      %p68 = scmp.ne.s32.totalorder %s59, %s60
      %p69 = scmp.eq.s32.totalorder %s16, 0
      %p70 = por %p68, %p69
      %p71 = scmp.ne.s32.totalorder %s59, %s60
      %p72 = scmp.eq.s32.totalorder %s17, 1
      %p73 = por %p71, %p72
      %p75 = scmp.ne.s32.totalorder %s60, %s74
      %p76 = scmp.eq.s32.totalorder %s17, 0
      %p77 = por %p75, %p76
      %s78 = ssub.s32 %s18, %s30
      %s79 = ssub.s32 %s19, %s26
      %s80 = sor.u32 %s78, %s79
      %p81 = scmp.eq.s32.totalorder %s80, 0
      %s83 = sadd.s32 %s82, 1
      %s84 = scalar_select %p81, %s82, %s83
      %p87 = pneg %p81
      %p88 = scmp.eq.s32.totalorder %s11, 1
      %p89 = por %p87, %p88
      %p90 = scmp.ne.s32.totalorder %s82, %s85
      %p91 = scmp.eq.s32.totalorder %s11, 0
      %p92 = por %p90, %p91
      %p93 = scmp.ne.s32.totalorder %s82, %s85
      %p94 = scmp.eq.s32.totalorder %s16, 1
      %p95 = por %p93, %p94
      %p96 = scmp.ne.s32.totalorder %s85, %s86
      %p97 = scmp.eq.s32.totalorder %s16, 0
      %p98 = por %p96, %p97
      %p99 = scmp.ne.s32.totalorder %s85, %s86
      %p100 = scmp.eq.s32.totalorder %s17, 1
      %p101 = por %p99, %p100
      %p103 = scmp.ne.s32.totalorder %s86, %s102
      %p104 = scmp.eq.s32.totalorder %s17, 0
      %p105 = por %p103, %p104
      %p106 = scmp.le.s32.totalorder 1, %s11
      %p107 = scmp.lt.s32.totalorder %s11, 3
      %p108 = pnand %p106, %p107
      %p109 = pneg %p108
      // Predicated region
      $region9: #{tpu_custom_call.1} parent=5 // pred_check
        _
      $region10: #{tpu_custom_call.1} parent=5 // pred_check_branch
        %111 = sbr.rel (%p108) target = $region12
      $region11: #{tpu_custom_call.1} parent=5 // pred_region
        %s112 = ssub.s32 %s11, 1
        // Predicated region
        $region13: #{tpu_custom_call.1} parent=11 // pred_check
          %p113 = pneg %p70
        $region14: #{tpu_custom_call.1} parent=11 // pred_check_branch
          %115 = sbr.rel (%p113) target = $region16
        $region15: #{tpu_custom_call.1} parent=11 // pred_region
          _
        $region16: #{tpu_custom_call.1} parent=11 // pred_fallthru
          _
      $region12: #{tpu_custom_call.1} parent=5 // pred_fallthru
        _
      %p116 = scmp.lt.s32.totalorder %s11, 2
      // Predicated region
      $region17: #{tpu_custom_call.1} parent=5 // pred_check
        %p117 = pneg %p116
      $region18: #{tpu_custom_call.1} parent=5 // pred_check_branch
        %119 = sbr.rel (%p117) target = $region20
      $region19: #{tpu_custom_call.1} parent=5 // pred_region
        // Predicated region
        $region21: #{tpu_custom_call.1} parent=19 // pred_check
          %p120 = pneg %p43
        $region22: #{tpu_custom_call.1} parent=19 // pred_check_branch
          %122 = sbr.rel (%p120) target = $region24
        $region23: #{tpu_custom_call.1} parent=19 // pred_region
          %p123 = scmp.lt.s32.totalorder %s18, 1
          %s124 = scalar_select %p123, %s18, 1
          %s125 = smul.addr %s124, 3
          %s126 = smul.addr %s125, 8
          %s127 = scalar_lea.vmem %s0, %s126
        $region24: #{tpu_custom_call.1} parent=19 // pred_fallthru
          _
      $region20: #{tpu_custom_call.1} parent=5 // pred_fallthru
        _
      %p128 = scmp.le.s32.totalorder 1, %s11
      %p129 = scmp.lt.s32.totalorder %s11, 3
      %p130 = pnand %p128, %p129
      %p131 = pneg %p130
      // Predicated region
      $region25: #{tpu_custom_call.1} parent=5 // pred_check
        _
      $region26: #{tpu_custom_call.1} parent=5 // pred_check_branch
        %133 = sbr.rel (%p130) target = $region28
      $region27: #{tpu_custom_call.1} parent=5 // pred_region
        %s134 = ssub.s32 %s11, 1
        %p135 = scmp.lt.s32.totalorder %s20, 1
        %s136 = scalar_select %p135, %s20, 1
        %s137 = smul.addr %s136, 3
        %s138 = smul.addr %s137, 8
        %s139 = scalar_lea.vmem %s0, %s138
        %p140 = pneg %p49
        %p141 = pneg %p46
        %p142 = pneg %p70
        %p143 = pneg %p67
        %p144 = pneg %p98
        %p145 = pneg %p95
        %s146 = sand.u32 %s85, 1
        %s147 = scalar_lea.sflag [#allocation6], %s146
        %s148 = sand.u32 %s85, 1
        %s149 = smul.addr %s148, 8
        %s150 = scalar_lea.vmem [#allocation5], %s149
        %p151 = scmp.lt.s32.totalorder %s20, 1
        %s152 = scalar_select %p151, %s20, 1
        %s153 = smul.addr %s152, 3
        %s154 = smul.addr %s153, 8
        %s155 = scalar_lea.vmem %s0, %s154
        %p156 = scmp.eq.s32.totalorder %s21, 0
        // Predicated region
        $region29: #{tpu_custom_call.1} parent=27 // pred_check
          %p157 = pneg %p156
        $region30: #{tpu_custom_call.1} parent=27 // pred_check_branch
          %159 = sbr.rel (%p157) target = $region32
        $region31: #{tpu_custom_call.1} parent=27 // pred_region
          %v160 = vld [vmem:[%s155] sm:$0xff]
          %v161 = vld [vmem:[%s155 + $0x8] sm:$0xff]
          %v162 = vld [vmem:[%s155 + $0x10] sm:$0xff]
          %v163 = vld [vmem:[%s1] sm:$0xff]
          %v164 = vld [vmem:[%s1 + $0x8] sm:$0xff]
          %v165 = vld [vmem:[%s1 + $0x10] sm:$0xff]
          %v166 = vld [vmem:[%s1 + $0x18] sm:$0xff]
          %v167 = vld [vmem:[%s1 + $0x20] sm:$0xff]
          %v168 = vld [vmem:[%s1 + $0x28] sm:$0xff]
          %v169 = vld [vmem:[%s1 + $0x30] sm:$0xff]
          %v170 = vld [vmem:[%s1 + $0x38] sm:$0xff]
          %v171 = vld [vmem:[%s1 + $0x40] sm:$0xff]
          %v172 = vld [vmem:[%s1 + $0x48] sm:$0xff]
          %v173 = vld [vmem:[%s1 + $0x50] sm:$0xff]
          %v174 = vld [vmem:[%s1 + $0x58] sm:$0xff]
          %v175 = vld [vmem:[%s1 + $0x60] sm:$0xff]
          %v176 = vld [vmem:[%s1 + $0x68] sm:$0xff]
          %v177 = vld [vmem:[%s1 + $0x70] sm:$0xff]
          %v178 = vld [vmem:[%s1 + $0x78] sm:$0xff]
          %v179 = vld [vmem:[%s1 + $0x80] sm:$0xff]
          %v180 = vld [vmem:[%s1 + $0x88] sm:$0xff]
          %v181 = vld [vmem:[%s1 + $0x90] sm:$0xff]
          %v182 = vld [vmem:[%s1 + $0x98] sm:$0xff]
          %v183 = vld [vmem:[%s1 + $0xa0] sm:$0xff]
          %v184 = vld [vmem:[%s1 + $0xa8] sm:$0xff]
          %v185 = vld [vmem:[%s1 + $0xb0] sm:$0xff]
          %v186 = vld [vmem:[%s1 + $0xb8] sm:$0xff]
          %v187 = vld [vmem:[%s1 + $0xc0] sm:$0xff]
          %v188 = vld [vmem:[%s1 + $0xc8] sm:$0xff]
          %v189 = vld [vmem:[%s1 + $0xd0] sm:$0xff]
          %v190 = vld [vmem:[%s1 + $0xd8] sm:$0xff]
          %v191 = vld [vmem:[%s1 + $0xe0] sm:$0xff]
          %v192 = vld [vmem:[%s1 + $0xe8] sm:$0xff]
          %v193 = vld [vmem:[%s1 + $0xf0] sm:$0xff]
          %v194 = vld [vmem:[%s1 + $0xf8] sm:$0xff]
          %v195 = vld [vmem:[%s1 + $0x100] sm:$0xff]
          %v196 = vld [vmem:[%s1 + $0x108] sm:$0xff]
          %v197 = vld [vmem:[%s1 + $0x110] sm:$0xff]
          %v198 = vld [vmem:[%s1 + $0x118] sm:$0xff]
          %v199 = vld [vmem:[%s1 + $0x120] sm:$0xff]
          %v200 = vld [vmem:[%s1 + $0x128] sm:$0xff]
          %v201 = vld [vmem:[%s1 + $0x130] sm:$0xff]
          %v202 = vld [vmem:[%s1 + $0x138] sm:$0xff]
          %v203 = vld [vmem:[%s1 + $0x140] sm:$0xff]
          %v204 = vld [vmem:[%s1 + $0x148] sm:$0xff]
          %v205 = vld [vmem:[%s1 + $0x150] sm:$0xff]
          %v206 = vld [vmem:[%s1 + $0x158] sm:$0xff]
          %v207 = vld [vmem:[%s1 + $0x160] sm:$0xff]
          %v208 = vld [vmem:[%s1 + $0x168] sm:$0xff]
          %v209 = vld [vmem:[%s1 + $0x170] sm:$0xff]
          %v210 = vld [vmem:[%s1 + $0x178] sm:$0xff]
          %v211 = vld [vmem:[%s1 + $0x180] sm:$0xff]
          %v212 = vld [vmem:[%s1 + $0x188] sm:$0xff]
          %v213 = vld [vmem:[%s1 + $0x190] sm:$0xff]
          %v214 = vld [vmem:[%s1 + $0x198] sm:$0xff]
          %v215 = vld [vmem:[%s1 + $0x1a0] sm:$0xff]
          %v216 = vld [vmem:[%s1 + $0x1a8] sm:$0xff]
          %v217 = vld [vmem:[%s1 + $0x1b0] sm:$0xff]
          %v218 = vld [vmem:[%s1 + $0x1b8] sm:$0xff]
          %v219 = vld [vmem:[%s1 + $0x1c0] sm:$0xff]
          %v220 = vld [vmem:[%s1 + $0x1c8] sm:$0xff]
          %v221 = vld [vmem:[%s1 + $0x1d0] sm:$0xff]
          %v222 = vld [vmem:[%s1 + $0x1d8] sm:$0xff]
          %v223 = vld [vmem:[%s1 + $0x1e0] sm:$0xff]
          %v224 = vld [vmem:[%s1 + $0x1e8] sm:$0xff]
          %v225 = vld [vmem:[%s1 + $0x1f0] sm:$0xff]
          %v226 = vld [vmem:[%s1 + $0x1f8] sm:$0xff]
          %v227 = vld [vmem:[%s1 + $0x200] sm:$0xff]
          %v228 = vld [vmem:[%s1 + $0x208] sm:$0xff]
          %v229 = vld [vmem:[%s1 + $0x210] sm:$0xff]
          %v230 = vld [vmem:[%s1 + $0x218] sm:$0xff]
          %v231 = vld [vmem:[%s1 + $0x220] sm:$0xff]
          %v232 = vld [vmem:[%s1 + $0x228] sm:$0xff]
          %v233 = vld [vmem:[%s1 + $0x230] sm:$0xff]
          %v234 = vld [vmem:[%s1 + $0x238] sm:$0xff]
          %v235 = vld [vmem:[%s1 + $0x240] sm:$0xff]
          %v236 = vld [vmem:[%s1 + $0x248] sm:$0xff]
          %v237 = vld [vmem:[%s1 + $0x250] sm:$0xff]
          %v238 = vld [vmem:[%s1 + $0x258] sm:$0xff]
          %v239 = vld [vmem:[%s1 + $0x260] sm:$0xff]
          %v240 = vld [vmem:[%s1 + $0x268] sm:$0xff]
          %v241 = vld [vmem:[%s1 + $0x270] sm:$0xff]
          %v242 = vld [vmem:[%s1 + $0x278] sm:$0xff]
          %v243 = vld [vmem:[%s1 + $0x280] sm:$0xff]
          %v244 = vld [vmem:[%s1 + $0x288] sm:$0xff]
          %v245 = vld [vmem:[%s1 + $0x290] sm:$0xff]
          %v246 = vld [vmem:[%s1 + $0x298] sm:$0xff]
          %v247 = vld [vmem:[%s1 + $0x2a0] sm:$0xff]
          %v248 = vld [vmem:[%s1 + $0x2a8] sm:$0xff]
          %v249 = vld [vmem:[%s1 + $0x2b0] sm:$0xff]
          %v250 = vld [vmem:[%s1 + $0x2b8] sm:$0xff]
          %v251 = vld [vmem:[%s1 + $0x2c0] sm:$0xff]
          %v252 = vld [vmem:[%s1 + $0x2c8] sm:$0xff]
          %v253 = vld [vmem:[%s1 + $0x2d0] sm:$0xff]
          %v254 = vld [vmem:[%s1 + $0x2d8] sm:$0xff]
          %v255 = vld [vmem:[%s1 + $0x2e0] sm:$0xff]
          %v256 = vld [vmem:[%s1 + $0x2e8] sm:$0xff]
          %v257 = vld [vmem:[%s1 + $0x2f0] sm:$0xff]
          %v258 = vld [vmem:[%s1 + $0x2f8] sm:$0xff]
          %259 = vmatprep.subr.mxu0 %v194
          %260 = vmatpush1.msra.mxu0 %v193
          %261 = vmatprep.subr.mxu0 %v192
          %262 = vmatpush1.msra.mxu0 %v191
          %263 = vmatprep.subr.mxu0 %v190
          %264 = vmatpush1.msra.mxu0 %v189
          %265 = vmatprep.subr.mxu0 %v188
          %266 = vmatpush1.msra.mxu0 %v187
          %267 = vmatprep.subr.mxu0 %v186
          %268 = vmatpush1.msra.mxu0 %v185
          %269 = vmatprep.subr.mxu0 %v184
          %270 = vmatpush1.msra.mxu0 %v183
          %271 = vmatprep.subr.mxu0 %v182
          %272 = vmatpush1.msra.mxu0 %v181
          %273 = vmatprep.subr.mxu0 %v180
          %274 = vmatpush1.msra.mxu0 %v179
          %275 = vmatprep.subr.mxu0 %v178
          %276 = vmatpush1.msra.mxu0 %v177
          %277 = vmatprep.subr.mxu0 %v176
          %278 = vmatpush1.msra.mxu0 %v175
          %279 = vmatprep.subr.mxu0 %v174
          %280 = vmatpush1.msra.mxu0 %v173
          %281 = vmatprep.subr.mxu0 %v172
          %282 = vmatpush1.msra.mxu0 %v171
          %283 = vmatprep.subr.mxu0 %v170
          %284 = vmatpush1.msra.mxu0 %v169
          %285 = vmatprep.subr.mxu0 %v168
          %286 = vmatpush1.msra.mxu0 %v167
          %287 = vmatprep.subr.mxu0 %v166
          %288 = vmatpush1.msra.mxu0 %v165
          %289 = vmatprep.subr.mxu0 %v164
          %290 = vmatpush1.msra.mxu0 %v163
          %291 = vmatprep.subr.mxu0 %v226
          %292 = vmatpush2.msra.mxu0 %v225
          %293 = vmatprep.subr.mxu0 %v224
          %294 = vmatpush2.msra.mxu0 %v223
          %295 = vmatprep.subr.mxu0 %v222
          %296 = vmatpush2.msra.mxu0 %v221
          %297 = vmatprep.subr.mxu0 %v220
          %298 = vmatpush2.msra.mxu0 %v219
          %299 = vmatprep.subr.mxu0 %v218
          %300 = vmatpush2.msra.mxu0 %v217
          %301 = vmatprep.subr.mxu0 %v216
          %302 = vmatpush2.msra.mxu0 %v215
          %303 = vmatprep.subr.mxu0 %v214
          %304 = vmatpush2.msra.mxu0 %v213
          %305 = vmatprep.subr.mxu0 %v212
          %306 = vmatpush2.msra.mxu0 %v211
          %307 = vmatprep.subr.mxu0 %v210
          %308 = vmatpush2.msra.mxu0 %v209
          %309 = vmatprep.subr.mxu0 %v208
          %310 = vmatpush2.msra.mxu0 %v207
          %311 = vmatprep.subr.mxu0 %v206
          %312 = vmatpush2.msra.mxu0 %v205
          %313 = vmatprep.subr.mxu0 %v204
          %314 = vmatpush2.msra.mxu0 %v203
          %315 = vmatprep.subr.mxu0 %v202
          %316 = vmatpush2.msra.mxu0 %v201
          %317 = vmatprep.subr.mxu0 %v200
          %318 = vmatpush2.msra.mxu0 %v199
          %319 = vmatprep.subr.mxu0 %v198
          %320 = vmatpush2.msra.mxu0 %v197
          %321 = vmatprep.subr.mxu0 %v196
          %322 = vmatpush2.msra.mxu0 %v195
          %323 = vmatprep.mubr.f32.mxu0 %v161
          %324 = vmatmul.mubr.f32.gmra.mxu0 %v160
          %v325 = vpop.f32.mrf.mxu0
          %v326 = vadd.f32 0.0, %v325
          %v327 = vpop.f32.mrf.mxu0
          %v328 = vadd.f32 0.0, %v327
          %329 = vdwg.mxu0
          %330 = vmatprep.subr.mxu0 %v258
          %331 = vmatpush1.msra.mxu0 %v257
          %332 = vmatprep.subr.mxu0 %v256
          %333 = vmatpush1.msra.mxu0 %v255
          %334 = vmatprep.subr.mxu0 %v254
          %335 = vmatpush1.msra.mxu0 %v253
          %336 = vmatprep.subr.mxu0 %v252
          %337 = vmatpush1.msra.mxu0 %v251
          %338 = vmatprep.subr.mxu0 %v250
          %339 = vmatpush1.msra.mxu0 %v249
          %340 = vmatprep.subr.mxu0 %v248
          %341 = vmatpush1.msra.mxu0 %v247
          %342 = vmatprep.subr.mxu0 %v246
          %343 = vmatpush1.msra.mxu0 %v245
          %344 = vmatprep.subr.mxu0 %v244
          %345 = vmatpush1.msra.mxu0 %v243
          %346 = vmatprep.subr.mxu0 %v242
          %347 = vmatpush1.msra.mxu0 %v241
          %348 = vmatprep.subr.mxu0 %v240
          %349 = vmatpush1.msra.mxu0 %v239
          %350 = vmatprep.subr.mxu0 %v238
          %351 = vmatpush1.msra.mxu0 %v237
          %352 = vmatprep.subr.mxu0 %v236
          %353 = vmatpush1.msra.mxu0 %v235
          %354 = vmatprep.subr.mxu0 %v234
          %355 = vmatpush1.msra.mxu0 %v233
          %356 = vmatprep.subr.mxu0 %v232
          %357 = vmatpush1.msra.mxu0 %v231
          %358 = vmatprep.subr.mxu0 %v230
          %359 = vmatpush1.msra.mxu0 %v229
          %360 = vmatprep.subr.mxu0 %v228
          %361 = vmatpush1.msra.mxu0 %v227
          %362 = vmatprep.subr.mxu0 0.0
          %363 = vmatpush2.msra.mxu0 0.0
          %364 = vmatprep.subr.mxu0 0.0
          %365 = vmatpush2.msra.mxu0 0.0
          %366 = vmatprep.subr.mxu0 0.0
          %367 = vmatpush2.msra.mxu0 0.0
          %368 = vmatprep.subr.mxu0 0.0
          %369 = vmatpush2.msra.mxu0 0.0
          %370 = vmatprep.subr.mxu0 0.0
          %371 = vmatpush2.msra.mxu0 0.0
          %372 = vmatprep.subr.mxu0 0.0
          %373 = vmatpush2.msra.mxu0 0.0
          %374 = vmatprep.subr.mxu0 0.0
          %375 = vmatpush2.msra.mxu0 0.0
          %376 = vmatprep.subr.mxu0 0.0
          %377 = vmatpush2.msra.mxu0 0.0
          %378 = vmatprep.subr.mxu0 0.0
          %379 = vmatpush2.msra.mxu0 0.0
          %380 = vmatprep.subr.mxu0 0.0
          %381 = vmatpush2.msra.mxu0 0.0
          %382 = vmatprep.subr.mxu0 0.0
          %383 = vmatpush2.msra.mxu0 0.0
          %384 = vmatprep.subr.mxu0 0.0
          %385 = vmatpush2.msra.mxu0 0.0
          %386 = vmatprep.subr.mxu0 0.0
          %387 = vmatpush2.msra.mxu0 0.0
          %388 = vmatprep.subr.mxu0 0.0
          %389 = vmatpush2.msra.mxu0 0.0
          %390 = vmatprep.subr.mxu0 0.0
          %391 = vmatpush2.msra.mxu0 0.0
          %392 = vmatprep.subr.mxu0 0.0
          %393 = vmatpush2.msra.mxu0 0.0
          %394 = vmatprep.mubr.f32.mxu0 0.0
          %395 = vmatmul.mubr.f32.gmra.mxu0 %v162
          %v396 = vpop.f32.mrf.mxu0
          %v397 = vadd.f32 %v326, %v396
          %v398 = vpop.f32.mrf.mxu0
          %v399 = vadd.f32 %v328, %v398
          %400 = vdwg.mxu0
          %vm401 = vcmask 523264
          %402 = vst.msk [vmem:[#allocation2] sm:$0xff] %vm401, %v397
          %v403 = vmul.f32 %v397, 0.05103104
          %405 = vrot.lane.b32.xlu0 %v403, 64
          %v406 = vpop.permute.xlu0 %405
          %408 = vst.msk [vmem:[#allocation3] sm:$0xff] %vm401, %v406
          %409 = vst.msk [vmem:[#allocation4] sm:$0xff] %vm401, %v399
        $region32: #{tpu_custom_call.1} parent=27 // pred_fallthru
          _
        %s410 = smul.u32 %s21, 8
        %s411 = scalar_lea.vmem [#allocation3], %s410
        %v412 = vld [vmem:[%s411] sm:$0xff]
        // While loop
        $region33: #{tpu_custom_call.1} parent=27 // loop_pre_header
          _
        $region34: #{tpu_custom_call.1} parent=27 // loop_header
          %s414 = sphi 0, %s416
          %p415 = scmp.ge.s32.totalorder %s414, %s21
          %v419 = vphi -inf, %v508
          %v420 = vphi 0.0, %v519
          %v421 = vphi 0.0, %v594
        $region35: #{tpu_custom_call.1} parent=27 // loop_header_branch
          %418 = sbr.rel (%p415) target = $region39
        $region36: #{tpu_custom_call.1} parent=27 // loop_body
          %s422 = smul.u32 %s414, 8
          %s423 = scalar_lea.vmem [#allocation2], %s422
          %v424 = vld [vmem:[%s423] sm:$0xff]
          %s425 = scalar_lea.vmem [#allocation4], %s422
          %v426 = vld [vmem:[%s425] sm:$0xff]
          %vm427 = vcmask 523264
          %v429 = vsel %vm427, %v412, 0
          %v432 = vsel %vm427, %v424, 0
          %434 = vmatprep.subr.mxu0 0.0
          %435 = vmatpush1.xpose.msra.mxu0 0.0
          %436 = vmatprep.subr.mxu0 0.0
          %437 = vmatpush1.xpose.msra.mxu0 0.0
          %438 = vmatprep.subr.mxu0 0.0
          %439 = vmatpush1.xpose.msra.mxu0 0.0
          %440 = vmatprep.subr.mxu0 0.0
          %441 = vmatpush1.xpose.msra.mxu0 0.0
          %442 = vmatprep.subr.mxu0 0.0
          %443 = vmatpush1.xpose.msra.mxu0 0.0
          %444 = vmatprep.subr.mxu0 0.0
          %445 = vmatpush1.xpose.msra.mxu0 0.0
          %446 = vmatprep.subr.mxu0 0.0
          %447 = vmatpush1.xpose.msra.mxu0 0.0
          %448 = vmatprep.subr.mxu0 0.0
          %449 = vmatpush1.xpose.msra.mxu0 0.0
          %450 = vmatprep.subr.mxu0 0.0
          %451 = vmatpush1.xpose.msra.mxu0 0.0
          %452 = vmatprep.subr.mxu0 0.0
          %453 = vmatpush1.xpose.msra.mxu0 0.0
          %454 = vmatprep.subr.mxu0 0.0
          %455 = vmatpush1.xpose.msra.mxu0 0.0
          %456 = vmatprep.subr.mxu0 0.0
          %457 = vmatpush1.xpose.msra.mxu0 0.0
          %458 = vmatprep.subr.mxu0 0.0
          %459 = vmatpush1.xpose.msra.mxu0 0.0
          %460 = vmatprep.subr.mxu0 0.0
          %461 = vmatpush1.xpose.msra.mxu0 0.0
          %462 = vmatprep.subr.mxu0 0.0
          %463 = vmatpush1.xpose.msra.mxu0 0.0
          %464 = vmatprep.subr.mxu0 0.0
          %465 = vmatpush1.xpose.msra.mxu0 %v432
          %466 = vmatprep.subr.mxu0 0.0
          %467 = vmatpush2.xpose.msra.mxu0 0.0
          %468 = vmatprep.subr.mxu0 0.0
          %469 = vmatpush2.xpose.msra.mxu0 0.0
          %470 = vmatprep.subr.mxu0 0.0
          %471 = vmatpush2.xpose.msra.mxu0 0.0
          %472 = vmatprep.subr.mxu0 0.0
          %473 = vmatpush2.xpose.msra.mxu0 0.0
          %474 = vmatprep.subr.mxu0 0.0
          %475 = vmatpush2.xpose.msra.mxu0 0.0
          %476 = vmatprep.subr.mxu0 0.0
          %477 = vmatpush2.xpose.msra.mxu0 0.0
          %478 = vmatprep.subr.mxu0 0.0
          %479 = vmatpush2.xpose.msra.mxu0 0.0
          %480 = vmatprep.subr.mxu0 0.0
          %481 = vmatpush2.xpose.msra.mxu0 0.0
          %482 = vmatprep.subr.mxu0 0.0
          %483 = vmatpush2.xpose.msra.mxu0 0.0
          %484 = vmatprep.subr.mxu0 0.0
          %485 = vmatpush2.xpose.msra.mxu0 0.0
          %486 = vmatprep.subr.mxu0 0.0
          %487 = vmatpush2.xpose.msra.mxu0 0.0
          %488 = vmatprep.subr.mxu0 0.0
          %489 = vmatpush2.xpose.msra.mxu0 0.0
          %490 = vmatprep.subr.mxu0 0.0
          %491 = vmatpush2.xpose.msra.mxu0 0.0
          %492 = vmatprep.subr.mxu0 0.0
          %493 = vmatpush2.xpose.msra.mxu0 0.0
          %494 = vmatprep.subr.mxu0 0.0
          %495 = vmatpush2.xpose.msra.mxu0 0.0
          %496 = vmatprep.subr.mxu0 0.0
          %497 = vmatpush2.xpose.msra.mxu0 0.0
          %498 = vmatprep.mubr.f32.mxu0 0.0
          %499 = vmatmul.mubr.f32.gmra.mxu0 %v429
          %v500 = vpop.f32.mrf.mxu0
          %v501 = vadd.f32 0.0, %v500
          %v502 = vpop.f32.mrf.mxu0
          %503 = vdwg.mxu0
          %vm504 = vcmask 64512
          %v505 = vsel %vm504, %v501, -inf
          %506 = vmax.xlane.f32.xlu0 %v505
          %v507 = vpop.xlane.xlu0 %506
          %v508 = vmax.f32 %v419, %v507
          %v509 = vsub.f32 %v419, %v508
          %v510 = vmul.f32 %v509, 1.442695
          %v511 = vpow.pop %v510
          %v512 = vsub.f32 %v501, %v508
          %v513 = vmul.f32 %v512, 1.442695
          %v514 = vpow.pop %v513
          %v515 = vmul.f32 %v511, %v420
          %v516 = vsel %vm504, %v514, 0.0
          %517 = vadd.xlane.f32.xlu0 %v516
          %v518 = vpop.xlane.xlu0 %517
          %v519 = vadd.f32 %v515, %v518
          %v520 = vmul.f32 %v511, %v421
          %v522 = vsel %vm504, %v514, 0
          %524 = vmatprep.subr.mxu0 0.0
          %525 = vmatpush1.msra.mxu0 0.0
          %526 = vmatprep.subr.mxu0 0.0
          %527 = vmatpush1.msra.mxu0 0.0
          %528 = vmatprep.subr.mxu0 0.0
          %529 = vmatpush1.msra.mxu0 0.0
          %530 = vmatprep.subr.mxu0 0.0
          %531 = vmatpush1.msra.mxu0 0.0
          %532 = vmatprep.subr.mxu0 0.0
          %533 = vmatpush1.msra.mxu0 0.0
          %534 = vmatprep.subr.mxu0 0.0
          %535 = vmatpush1.msra.mxu0 0.0
          %536 = vmatprep.subr.mxu0 0.0
          %537 = vmatpush1.msra.mxu0 0.0
          %538 = vmatprep.subr.mxu0 0.0
          %539 = vmatpush1.msra.mxu0 0.0
          %540 = vmatprep.subr.mxu0 0.0
          %541 = vmatpush1.msra.mxu0 0.0
          %542 = vmatprep.subr.mxu0 0.0
          %543 = vmatpush1.msra.mxu0 0.0
          %544 = vmatprep.subr.mxu0 0.0
          %545 = vmatpush1.msra.mxu0 0.0
          %546 = vmatprep.subr.mxu0 0.0
          %547 = vmatpush1.msra.mxu0 0.0
          %548 = vmatprep.subr.mxu0 0.0
          %549 = vmatpush1.msra.mxu0 0.0
          %550 = vmatprep.subr.mxu0 0.0
          %551 = vmatpush1.msra.mxu0 0.0
          %552 = vmatprep.subr.mxu0 0.0
          %553 = vmatpush1.msra.mxu0 0.0
          %554 = vmatprep.subr.mxu0 0.0
          %555 = vmatpush1.msra.mxu0 %v426
          %556 = vmatprep.subr.mxu0 0.0
          %557 = vmatpush2.msra.mxu0 0.0
          %558 = vmatprep.subr.mxu0 0.0
          %559 = vmatpush2.msra.mxu0 0.0
          %560 = vmatprep.subr.mxu0 0.0
          %561 = vmatpush2.msra.mxu0 0.0
          %562 = vmatprep.subr.mxu0 0.0
          %563 = vmatpush2.msra.mxu0 0.0
          %564 = vmatprep.subr.mxu0 0.0
          %565 = vmatpush2.msra.mxu0 0.0
          %566 = vmatprep.subr.mxu0 0.0
          %567 = vmatpush2.msra.mxu0 0.0
          %568 = vmatprep.subr.mxu0 0.0
          %569 = vmatpush2.msra.mxu0 0.0
          %570 = vmatprep.subr.mxu0 0.0
          %571 = vmatpush2.msra.mxu0 0.0
          %572 = vmatprep.subr.mxu0 0.0
          %573 = vmatpush2.msra.mxu0 0.0
          %574 = vmatprep.subr.mxu0 0.0
          %575 = vmatpush2.msra.mxu0 0.0
          %576 = vmatprep.subr.mxu0 0.0
          %577 = vmatpush2.msra.mxu0 0.0
          %578 = vmatprep.subr.mxu0 0.0
          %579 = vmatpush2.msra.mxu0 0.0
          %580 = vmatprep.subr.mxu0 0.0
          %581 = vmatpush2.msra.mxu0 0.0
          %582 = vmatprep.subr.mxu0 0.0
          %583 = vmatpush2.msra.mxu0 0.0
          %584 = vmatprep.subr.mxu0 0.0
          %585 = vmatpush2.msra.mxu0 0.0
          %586 = vmatprep.subr.mxu0 0.0
          %587 = vmatpush2.msra.mxu0 0.0
          %588 = vmatprep.mubr.f32.mxu0 0.0
          %589 = vmatmul.mubr.f32.gmra.mxu0 %v522
          %v590 = vpop.f32.mrf.mxu0
          %v591 = vadd.f32 0.0, %v590
          %v592 = vpop.f32.mrf.mxu0
          %593 = vdwg.mxu0
          %v594 = vadd.f32 %v520, %v591
        $region37: #{tpu_custom_call.1} parent=27 // loop_footer
          %s416 = sadd.s32 %s414, 1
        $region38: #{tpu_custom_call.1} parent=27 // loop_footer_branch
          %413 = sbr.rel target = $region34
        $region39: #{tpu_custom_call.1} parent=27 // loop_exit
          _
        %s595 = scalar_lea.vmem [#allocation2], %s410
        %v596 = vld [vmem:[%s595] sm:$0xff]
        %s597 = scalar_lea.vmem [#allocation4], %s410
        %v598 = vld [vmem:[%s597] sm:$0xff]
        %vm599 = vcmask 523264
        %v601 = vsel %vm599, %v412, 0
        %v604 = vsel %vm599, %v596, 0
        %606 = vmatprep.subr.mxu0 0.0
        %607 = vmatpush1.xpose.msra.mxu0 0.0
        %608 = vmatprep.subr.mxu0 0.0
        %609 = vmatpush1.xpose.msra.mxu0 0.0
        %610 = vmatprep.subr.mxu0 0.0
        %611 = vmatpush1.xpose.msra.mxu0 0.0
        %612 = vmatprep.subr.mxu0 0.0
        %613 = vmatpush1.xpose.msra.mxu0 0.0
        %614 = vmatprep.subr.mxu0 0.0
        %615 = vmatpush1.xpose.msra.mxu0 0.0
        %616 = vmatprep.subr.mxu0 0.0
        %617 = vmatpush1.xpose.msra.mxu0 0.0
        %618 = vmatprep.subr.mxu0 0.0
        %619 = vmatpush1.xpose.msra.mxu0 0.0
        %620 = vmatprep.subr.mxu0 0.0
        %621 = vmatpush1.xpose.msra.mxu0 0.0
        %622 = vmatprep.subr.mxu0 0.0
        %623 = vmatpush1.xpose.msra.mxu0 0.0
        %624 = vmatprep.subr.mxu0 0.0
        %625 = vmatpush1.xpose.msra.mxu0 0.0
        %626 = vmatprep.subr.mxu0 0.0
        %627 = vmatpush1.xpose.msra.mxu0 0.0
        %628 = vmatprep.subr.mxu0 0.0
        %629 = vmatpush1.xpose.msra.mxu0 0.0
        %630 = vmatprep.subr.mxu0 0.0
        %631 = vmatpush1.xpose.msra.mxu0 0.0
        %632 = vmatprep.subr.mxu0 0.0
        %633 = vmatpush1.xpose.msra.mxu0 0.0
        %634 = vmatprep.subr.mxu0 0.0
        %635 = vmatpush1.xpose.msra.mxu0 0.0
        %636 = vmatprep.subr.mxu0 0.0
        %637 = vmatpush1.xpose.msra.mxu0 %v604
        %638 = vmatprep.subr.mxu0 0.0
        %639 = vmatpush2.xpose.msra.mxu0 0.0
        %640 = vmatprep.subr.mxu0 0.0
        %641 = vmatpush2.xpose.msra.mxu0 0.0
        %642 = vmatprep.subr.mxu0 0.0
        %643 = vmatpush2.xpose.msra.mxu0 0.0
        %644 = vmatprep.subr.mxu0 0.0
        %645 = vmatpush2.xpose.msra.mxu0 0.0
        %646 = vmatprep.subr.mxu0 0.0
        %647 = vmatpush2.xpose.msra.mxu0 0.0
        %648 = vmatprep.subr.mxu0 0.0
        %649 = vmatpush2.xpose.msra.mxu0 0.0
        %650 = vmatprep.subr.mxu0 0.0
        %651 = vmatpush2.xpose.msra.mxu0 0.0
        %652 = vmatprep.subr.mxu0 0.0
        %653 = vmatpush2.xpose.msra.mxu0 0.0
        %654 = vmatprep.subr.mxu0 0.0
        %655 = vmatpush2.xpose.msra.mxu0 0.0
        %656 = vmatprep.subr.mxu0 0.0
        %657 = vmatpush2.xpose.msra.mxu0 0.0
        %658 = vmatprep.subr.mxu0 0.0
        %659 = vmatpush2.xpose.msra.mxu0 0.0
        %660 = vmatprep.subr.mxu0 0.0
        %661 = vmatpush2.xpose.msra.mxu0 0.0
        %662 = vmatprep.subr.mxu0 0.0
        %663 = vmatpush2.xpose.msra.mxu0 0.0
        %664 = vmatprep.subr.mxu0 0.0
        %665 = vmatpush2.xpose.msra.mxu0 0.0
        %666 = vmatprep.subr.mxu0 0.0
        %667 = vmatpush2.xpose.msra.mxu0 0.0
        %668 = vmatprep.subr.mxu0 0.0
        %669 = vmatpush2.xpose.msra.mxu0 0.0
        %670 = vmatprep.mubr.f32.mxu0 0.0
        %671 = vmatmul.mubr.f32.gmra.mxu0 %v601
        %v672 = vpop.f32.mrf.mxu0
        %v673 = vadd.f32 0.0, %v672
        %v674 = vpop.f32.mrf.mxu0
        %675 = vdwg.mxu0
        %v676 = vlaneseq
        %v677 = vshrl.u32 %v676, 7
        %v678 = vstv %s410
        %v679 = vadd.s32 %v678, %v677
        %v680 = vlaneseq
        %v681 = vand.u32 %v680, 127
        %v682 = vadd.s32 %v678, %v681
        %vm683 = vcmp.ge.s32.totalorder %v679, %v682
        %v684 = vsel %vm683, %v673, -inf
        %vm685 = vcmask 64512
        %v686 = vsel %vm685, %v684, -inf
        %687 = vmax.xlane.f32.xlu0 %v686
        %v688 = vpop.xlane.xlu0 %687
        %v689 = vmax.f32 %v419, %v688
        %v690 = vsub.f32 %v419, %v689
        %v691 = vmul.f32 %v690, 1.442695
        %v692 = vpow.pop %v691
        %v693 = vsub.f32 %v684, %v689
        %v694 = vmul.f32 %v693, 1.442695
        %v695 = vpow.pop %v694
        %v696 = vmul.f32 %v692, %v420
        %v697 = vsel %vm685, %v695, 0.0
        %698 = vadd.xlane.f32.xlu0 %v697
        %v699 = vpop.xlane.xlu0 %698
        %v700 = vadd.f32 %v696, %v699
        %v701 = vmul.f32 %v692, %v421
        %v703 = vsel %vm685, %v695, 0
        %705 = vmatprep.subr.mxu0 0.0
        %706 = vmatpush1.msra.mxu0 0.0
        %707 = vmatprep.subr.mxu0 0.0
        %708 = vmatpush1.msra.mxu0 0.0
        %709 = vmatprep.subr.mxu0 0.0
        %710 = vmatpush1.msra.mxu0 0.0
        %711 = vmatprep.subr.mxu0 0.0
        %712 = vmatpush1.msra.mxu0 0.0
        %713 = vmatprep.subr.mxu0 0.0
        %714 = vmatpush1.msra.mxu0 0.0
        %715 = vmatprep.subr.mxu0 0.0
        %716 = vmatpush1.msra.mxu0 0.0
        %717 = vmatprep.subr.mxu0 0.0
        %718 = vmatpush1.msra.mxu0 0.0
        %719 = vmatprep.subr.mxu0 0.0
        %720 = vmatpush1.msra.mxu0 0.0
        %721 = vmatprep.subr.mxu0 0.0
        %722 = vmatpush1.msra.mxu0 0.0
        %723 = vmatprep.subr.mxu0 0.0
        %724 = vmatpush1.msra.mxu0 0.0
        %725 = vmatprep.subr.mxu0 0.0
        %726 = vmatpush1.msra.mxu0 0.0
        %727 = vmatprep.subr.mxu0 0.0
        %728 = vmatpush1.msra.mxu0 0.0
        %729 = vmatprep.subr.mxu0 0.0
        %730 = vmatpush1.msra.mxu0 0.0
        %731 = vmatprep.subr.mxu0 0.0
        %732 = vmatpush1.msra.mxu0 0.0
        %733 = vmatprep.subr.mxu0 0.0
        %734 = vmatpush1.msra.mxu0 0.0
        %735 = vmatprep.subr.mxu0 0.0
        %736 = vmatpush1.msra.mxu0 %v598
        %737 = vmatprep.subr.mxu0 0.0
        %738 = vmatpush2.msra.mxu0 0.0
        %739 = vmatprep.subr.mxu0 0.0
        %740 = vmatpush2.msra.mxu0 0.0
        %741 = vmatprep.subr.mxu0 0.0
        %742 = vmatpush2.msra.mxu0 0.0
        %743 = vmatprep.subr.mxu0 0.0
        %744 = vmatpush2.msra.mxu0 0.0
        %745 = vmatprep.subr.mxu0 0.0
        %746 = vmatpush2.msra.mxu0 0.0
        %747 = vmatprep.subr.mxu0 0.0
        %748 = vmatpush2.msra.mxu0 0.0
        %749 = vmatprep.subr.mxu0 0.0
        %750 = vmatpush2.msra.mxu0 0.0
        %751 = vmatprep.subr.mxu0 0.0
        %752 = vmatpush2.msra.mxu0 0.0
        %753 = vmatprep.subr.mxu0 0.0
        %754 = vmatpush2.msra.mxu0 0.0
        %755 = vmatprep.subr.mxu0 0.0
        %756 = vmatpush2.msra.mxu0 0.0
        %757 = vmatprep.subr.mxu0 0.0
        %758 = vmatpush2.msra.mxu0 0.0
        %759 = vmatprep.subr.mxu0 0.0
        %760 = vmatpush2.msra.mxu0 0.0
        %761 = vmatprep.subr.mxu0 0.0
        %762 = vmatpush2.msra.mxu0 0.0
        %763 = vmatprep.subr.mxu0 0.0
        %764 = vmatpush2.msra.mxu0 0.0
        %765 = vmatprep.subr.mxu0 0.0
        %766 = vmatpush2.msra.mxu0 0.0
        %767 = vmatprep.subr.mxu0 0.0
        %768 = vmatpush2.msra.mxu0 0.0
        %769 = vmatprep.mubr.f32.mxu0 0.0
        %770 = vmatmul.mubr.f32.gmra.mxu0 %v703
        %v771 = vpop.f32.mrf.mxu0
        %v772 = vadd.f32 0.0, %v771
        %v773 = vpop.f32.mrf.mxu0
        %774 = vdwg.mxu0
        %v775 = vadd.f32 %v701, %v772
        %v776 = vrcp.pop %v700
        %v777 = vmul.f32 %v775, %v776
        %778 = vst.msk [vmem:[%s150] sm:$0xff] %vm599, %v777
        %s779 = sand.u32 %s85, 1
        %s780 = scalar_lea.sflag [#allocation6], %s779
        %s781 = sand.u32 %s85, 1
        %s782 = smul.addr %s781, 8
        %s783 = scalar_lea.vmem [#allocation5], %s782
        // Predicated region
        $region40: #{tpu_custom_call.1} parent=27 // pred_check
          %p784 = pneg %p95
        $region41: #{tpu_custom_call.1} parent=27 // pred_check_branch
          %786 = sbr.rel (%p784) target = $region43
        $region42: #{tpu_custom_call.1} parent=27 // pred_region
          %s788 = ssub.s32 128, 128
          %789 = vsyncadd %s780, %s788
          %s790 = sadd.s32 %s21, %s20
          %s791 = smul.addr %s790, 128
          %s792 = scalar_lea.hbm %s2, %s791
          %s794 = sshll.u32 %s783, 4
          %s795 = int_to_ptr.vmem [resolvable:$true] %s794
          %797 = dma.vmem_to_hbm [thread:$0]  %s795, 128, %s792, %s780
        $region43: #{tpu_custom_call.1} parent=27 // pred_fallthru
          _
      $region28: #{tpu_custom_call.1} parent=5 // pred_fallthru
        _
      %p798 = scmp.le.s32.totalorder 2, %s11
      // Predicated region
      $region44: #{tpu_custom_call.1} parent=5 // pred_check
        %p799 = pneg %p798
      $region45: #{tpu_custom_call.1} parent=5 // pred_check_branch
        %801 = sbr.rel (%p799) target = $region47
      $region46: #{tpu_custom_call.1} parent=5 // pred_region
        %s802 = ssub.s32 %s11, 2
        // Predicated region
        $region48: #{tpu_custom_call.1} parent=46 // pred_check
          %p803 = pneg %p101
        $region49: #{tpu_custom_call.1} parent=46 // pred_check_branch
          %805 = sbr.rel (%p803) target = $region51
        $region50: #{tpu_custom_call.1} parent=46 // pred_region
          %s806 = sand.u32 %s86, 1
          %s807 = scalar_lea.sflag [#allocation6], %s806
          %s808 = sand.u32 %s86, 1
          %s809 = smul.addr %s808, 8
          %s810 = scalar_lea.vmem [#allocation5], %s809
          %811 = dma.done %s807, 128
        $region51: #{tpu_custom_call.1} parent=46 // pred_fallthru
          _
      $region47: #{tpu_custom_call.1} parent=5 // pred_fallthru
        _
    $region6: #{tpu_custom_call.1} parent=1 // loop_footer
      %s15 = sadd.s32 1, %s11
    $region7: #{tpu_custom_call.1} parent=1 // loop_footer_branch
      %10 = sbr.rel target = $region3
    $region8: #{tpu_custom_call.1} parent=1 // loop_exit
      _
    %812 = vsyncpa [#allocation6], 1
    %s813 = scalar_lea.sflag [#allocation6], 1
    %814 = vsyncpa %s813, 1

</llo_original>
